<compile_context>
chip_gen: v6e
topology: v6e:2x2x1
jax: 0.10.0
libtpu: 0.0.40
codegen_flags: <defaults>
</compile_context>

<pallas_src>
import functools
import math

import jax
import jax.numpy as jnp
from jax.experimental import pallas as pl
from jax.experimental.pallas import tpu as pltpu

_LANE = 128
_SUB = 8


def _stats(x, t):
    """Stable BCE-with-logits, sigmoid and intersection for one f32 slab."""
    e = jnp.exp(-jnp.abs(x))                        # single EUP exp per element
    bce = jnp.maximum(x, 0.0) - x * t + jnp.log1p(e)
    denom = 1.0 + e
    r = pl.reciprocal(denom, approx=True)           # EUP vrcp (free-ish slot)
    r = r * (2.0 - denom * r)                       # one Newton step -> f32 accurate
    sig = jnp.where(x >= 0.0, 1.0, e) * r           # == sigmoid(x)
    return bce, sig, sig * t


def _fold(a):
    """(r, 128) -> (8, 128) by summing whole (8,128) vregs (pure VPU adds)."""
    return a.reshape(a.shape[0] // _SUB, _SUB, _LANE).sum(axis=0)


def _bce_dice_kernel(x_ref, t_ref, out_ref, acc_ref, *, rows, strip, n_total,
                     need_mask):
    j = pl.program_id(1)
    nj = pl.num_programs(1)

    @pl.when(j == 0)
    def _():
        acc_ref[...] = jnp.zeros_like(acc_ref)

    def hot_chunk():
        # Strip loop: intermediates stay strip-sized; the four (8,128)
        # accumulators travel in vregs as fori_loop carries.
        nstrips = rows // strip

        def body(s, carry):
            b_acc, i_acc, s_acc, t_acc = carry
            off = s * strip
            if not isinstance(off, int):
                off = pl.multiple_of(off, strip)
            xs = x_ref[0, pl.ds(off, strip), :].astype(jnp.float32)
            ts = t_ref[0, pl.ds(off, strip), :].astype(jnp.float32)
            bce, sig, inter = _stats(xs, ts)
            return (b_acc + _fold(bce), i_acc + _fold(inter),
                    s_acc + _fold(sig), t_acc + _fold(ts))

        zero = jnp.zeros((_SUB, _LANE), jnp.float32)
        b_acc, i_acc, s_acc, t_acc = jax.lax.fori_loop(
            0, nstrips, body, (zero, zero, zero, zero), unroll=True)
        acc_ref[0, :, :] += b_acc
        acc_ref[1, :, :] += i_acc
        acc_ref[2, :, :] += s_acc
        acc_ref[3, :, :] += t_acc

    def masked_chunk():
        # Cold path: only the last chunk can hold padded / out-of-bounds rows.
        x = x_ref[0, :, :].astype(jnp.float32)
        t = t_ref[0, :, :].astype(jnp.float32)
        row = jax.lax.broadcasted_iota(jnp.int32, (rows, _LANE), 0) + j * rows
        col = jax.lax.broadcasted_iota(jnp.int32, (rows, _LANE), 1)
        full_rows = n_total // _LANE
        rem = n_total % _LANE
        valid = row < full_rows
        if rem:
            valid = jnp.logical_or(
                valid, jnp.logical_and(row == full_rows, col < rem))
        bce, sig, _ = _stats(x, t)
        # where (select), NOT multiply: OOB lanes may hold NaN/Inf garbage.
        bce = jnp.where(valid, bce, 0.0)
        sig = jnp.where(valid, sig, 0.0)
        t = jnp.where(valid, t, 0.0)
        acc_ref[0, :, :] += _fold(bce)
        acc_ref[1, :, :] += _fold(sig * t)
        acc_ref[2, :, :] += _fold(sig)
        acc_ref[3, :, :] += _fold(t)

    if need_mask:
        @pl.when(j < nj - 1)
        def _():
            hot_chunk()

        @pl.when(j == nj - 1)
        def _():
            masked_chunk()
    else:
        hot_chunk()

    # Fused epilogue: cross-lane reduce + dice/BCE scalar math once per sample;
    # removes the (B,4,8,128) HBM writeback and the separate tiny XLA op.
    @pl.when(j == nj - 1)
    def _():
        bce_sum = jnp.sum(acc_ref[0, :, :], keepdims=True)      # (1, 1)
        inter_sum = jnp.sum(acc_ref[1, :, :], keepdims=True)
        sig_sum = jnp.sum(acc_ref[2, :, :], keepdims=True)
        tgt_sum = jnp.sum(acc_ref[3, :, :], keepdims=True)
        smooth = 1e-05
        bce_mean = bce_sum * (1.0 / n_total)
        dice = (2.0 * inter_sum + smooth) / (sig_sum + tgt_sum + smooth)
        loss = 0.5 * bce_mean + (1.0 - dice)                     # (1, 1)
        out_ref[...] = jnp.broadcast_to(loss.reshape(1, 1, 1),
                                        (1, _SUB, _LANE))


def bce_dice_loss(logits, target, *, max_rows_per_chunk=4096, strip_rows=256):
    """logits: (B, ...) float; target: (B, ...) any dtype castable to f32
    (bf16 is exact for 0/1 masks and halves its HBM traffic; int8 also works).
    Returns (B, 1, 1) float32, matching BCEDiceLoss_splite.forward."""
    B = logits.shape[0]
    n_total = math.prod(logits.shape[1:])

    x2 = logits.reshape(B, n_total)
    t2 = target.reshape(B, n_total)

    # Lane/sublane-dense layout: (B, M, 128) with M a multiple of 8.
    m_rows = pl.cdiv(n_total, _SUB * _LANE) * _SUB
    n_pad = m_rows * _LANE
    if n_pad != n_total:
        # Only hit when C*H*W is not a multiple of 1024; one HBM pad copy and
        # the padded tail is masked in-kernel.
        pad = ((0, 0), (0, n_pad - n_total))
        x2 = jnp.pad(x2, pad)
        t2 = jnp.pad(t2, pad)
    x3 = x2.reshape(B, m_rows, _LANE)
    t3 = t2.reshape(B, m_rows, _LANE)

    # Chunk = BlockSpec/DMA granularity: big enough to amortize the ~0.35us
    # per-step overhead, small enough to double-buffer comfortably on every
    # generation (v7x has only 64 MiB VMEM per core).
    rows = min(m_rows, max_rows_per_chunk)
    rows = max(_SUB, (rows // _SUB) * _SUB)
    # Strip = in-kernel fusion granularity; must divide `rows`.
    strip = max(_SUB, (min(strip_rows, rows) // _SUB) * _SUB)
    while rows % strip:
        strip -= _SUB
    num_chunks = pl.cdiv(m_rows, rows)
    need_mask = (n_pad != n_total) or (m_rows % rows != 0)

    kernel = functools.partial(
        _bce_dice_kernel, rows=rows, strip=strip, n_total=n_total,
        need_mask=need_mask)

    in_bytes = B * n_total * (x3.dtype.itemsize + t3.dtype.itemsize)
    cost = pl.CostEstimate(
        flops=16 * B * n_total,
        transcendentals=3 * B * n_total,
        bytes_accessed=in_bytes + B * _SUB * _LANE * 4,
    )

    # TODO(synk): v7x-only follow-up — when B == 1 (or odd), core-split the
    # chunk axis (grid=(2, B, chunks//2), per-core partial slabs summed in a
    # tiny epilogue) so both TensorCores stay busy; for B >= 2 the 'parallel'
    # b axis already feeds both cores.
    out = pl.pallas_call(
        kernel,
        out_shape=jax.ShapeDtypeStruct((B, _SUB, _LANE), jnp.float32),
        grid_spec=pltpu.PrefetchScalarGridSpec(
            num_scalar_prefetch=0,
            grid=(B, num_chunks),
            in_specs=[
                pl.BlockSpec((1, rows, _LANE), lambda b, j: (b, j, 0)),
                pl.BlockSpec((1, rows, _LANE), lambda b, j: (b, j, 0)),
            ],
            out_specs=pl.BlockSpec((1, _SUB, _LANE), lambda b, j: (b, 0, 0)),
            scratch_shapes=[pltpu.VMEM((4, _SUB, _LANE), jnp.float32)],
        ),
        compiler_params=pltpu.CompilerParams(
            dimension_semantics=("parallel", "arbitrary"),
            vmem_limit_bytes=40 * 1024 * 1024,
        ),
        cost_estimate=cost,
    )(x3, t3)

    # Lane-dense (B, 8, 128) slab with the loss broadcast; slice to (B, 1, 1).
    return out[:, :1, :1]


def _reference(logits, target):
    """Pure-JAX reference with the same math as the PyTorch module."""
    B = logits.shape[0]
    x2 = logits.reshape(B, -1).astype(jnp.float32)
    t2 = target.reshape(B, -1).astype(jnp.float32)
    bce = jnp.mean(jnp.maximum(x2, 0.0) - x2 * t2 +
                   jnp.log1p(jnp.exp(-jnp.abs(x2))), axis=1)
    s = jax.nn.sigmoid(x2)
    smooth = 1e-05
    dice = (2.0 * jnp.sum(s * t2, 1) + smooth) / (
        jnp.sum(s, 1) + jnp.sum(t2, 1) + smooth)
    return (0.5 * bce + (1.0 - dice))[:, None, None]


if __name__ == "__main__":
    key = jax.random.PRNGKey(0)
    k1, k2, k3, k4 = jax.random.split(key, 4)

    # Case 1: the module's nominal small shape; binary-mask target passed as
    # bf16 (exact for 0/1, halves its HBM traffic).
    B, C, H, W = 2, 4, 16, 16
    logits = jax.random.normal(k1, (B, C, H, W), dtype=jnp.float32)
    target = (jax.random.uniform(k2, (B, C, H, W)) > 0.5).astype(jnp.float32)
    loss = bce_dice_loss(logits, target.astype(jnp.bfloat16))
    jax.block_until_ready(loss)
    ref = _reference(logits, target)
    assert loss.shape == (B, 1, 1), loss.shape
    assert jnp.allclose(loss, ref, rtol=1e-5, atol=1e-5), (loss, ref)

    # Case 2: soft f32 labels with small chunk/strip overrides so the strip
    # loop, multi-chunk accumulation and ragged-last-chunk masking all run.
    B2, C2, H2, W2 = 2, 4, 32, 40
    logits2 = jax.random.normal(k3, (B2, C2, H2, W2), dtype=jnp.float32)
    target2 = jax.random.uniform(k4, (B2, C2, H2, W2), dtype=jnp.float32)
    loss2 = bce_dice_loss(logits2, target2, max_rows_per_chunk=16, strip_rows=8)
    jax.block_until_ready(loss2)
    ref2 = _reference(logits2, target2)
    assert jnp.allclose(loss2, ref2, rtol=1e-5, atol=1e-5), (loss2, ref2)

    print("KERNEL_OK")
</pallas_src>

<mosaic_0001>
module attributes {stable_mosaic.version = 11 : i64} {
  func.func @_bce_dice_kernel(%arg0: i32, %arg1: i32, %arg2: memref<1x8x128xf32, #tpu.memory_space<vmem>>, %arg3: memref<1x8x128xbf16, #tpu.memory_space<vmem>>, %arg4: memref<1x8x128xf32, #tpu.memory_space<vmem>>, %arg5: memref<4x8x128xf32, #tpu.memory_space<vmem>>) attributes {dimension_semantics = [#tpu.dimension_semantics<parallel>, #tpu.dimension_semantics<arbitrary>], iteration_bounds = array<i64: 2, 1>, scalar_prefetch = 0 : i64, scratch_operands = 1 : i64, tpu.core_type = #tpu.core_type<tc>, window_params = [{transform_indices = @transform_0, window_bounds = array<i64: 1, 8, 128>}, {transform_indices = @transform_1, window_bounds = array<i64: 1, 8, 128>}, {transform_indices = @transform_2, window_bounds = array<i64: 1, 8, 128>}]} {
    %c0_i32 = arith.constant 0 : i32
    %0 = arith.cmpi eq, %arg1, %c0_i32 : i32
    %1 = arith.extui %0 : i1 to i32
    %c0_i32_0 = arith.constant 0 : i32
    %2 = arith.cmpi ne, %1, %c0_i32_0 : i32
    scf.if %2 {
      %cst_38 = arith.constant 0.000000e+00 : f32
      %75 = vector.broadcast %cst_38 : f32 to vector<4x8x128xf32>
      %c0_39 = arith.constant 0 : index
      %c0_40 = arith.constant 0 : index
      %c0_41 = arith.constant 0 : index
      %76 = vector.load %arg5[%c0_39, %c0_40, %c0_41] : memref<4x8x128xf32, #tpu.memory_space<vmem>>, vector<4x8x128xf32>
      tpu.vector_store %arg5[%c0_39, %c0_40, %c0_41], %75 {strides = array<i32>} : memref<4x8x128xf32, #tpu.memory_space<vmem>>, vector<4x8x128xf32>,
    } else {
    }
    %cst = arith.constant 0.000000e+00 : f32
    %3 = vector.broadcast %cst : f32 to vector<8x128xf32>
    %c0_i32_1 = arith.constant 0 : i32
    %c8_i32 = arith.constant 8 : i32
    %4 = arith.muli %c0_i32_1, %c8_i32 : i32
    %5 = tpu.assume_multiple %4, 8 : i32
    %c0 = arith.constant 0 : index
    %6 = arith.index_cast %5 : i32 to index
    %c0_2 = arith.constant 0 : index
    %7 = vector.load %arg2[%c0, %6, %c0_2] : memref<1x8x128xf32, #tpu.memory_space<vmem>>, vector<1x8x128xf32>
    %8 = vector.shape_cast %7 : vector<1x8x128xf32> to vector<8x128xf32>
    %c0_3 = arith.constant 0 : index
    %9 = arith.index_cast %5 : i32 to index
    %c0_4 = arith.constant 0 : index
    %10 = vector.load %arg3[%c0_3, %9, %c0_4] : memref<1x8x128xbf16, #tpu.memory_space<vmem>>, vector<1x8x128xbf16>
    %11 = vector.shape_cast %10 : vector<1x8x128xbf16> to vector<8x128xbf16>
    %12 = arith.extf %11 : vector<8x128xbf16> to vector<8x128xf32>
    %13 = math.absf %8 : vector<8x128xf32>
    %cst_5 = arith.constant 0.000000e+00 : f32
    %14 = vector.broadcast %cst_5 : f32 to vector<8x128xf32>
    %15 = arith.subf %14, %13 : vector<8x128xf32>
    %16 = math.exp %15 : vector<8x128xf32>
    %cst_6 = arith.constant 0.000000e+00 : f32
    %17 = vector.broadcast %cst_6 : f32 to vector<8x128xf32>
    %18 = arith.maximumf %8, %17 : vector<8x128xf32>
    %19 = arith.mulf %8, %12 : vector<8x128xf32>
    %20 = arith.subf %18, %19 : vector<8x128xf32>
    %21 = math.log1p %16 : vector<8x128xf32>
    %22 = arith.addf %20, %21 : vector<8x128xf32>
    %cst_7 = arith.constant 1.000000e+00 : f32
    %23 = vector.broadcast %cst_7 : f32 to vector<8x128xf32>
    %24 = arith.addf %23, %16 : vector<8x128xf32>
    %25 = tpu.reciprocal %24 {approx = true} : vector<8x128xf32> -> vector<8x128xf32>
    %26 = arith.mulf %24, %25 : vector<8x128xf32>
    %cst_8 = arith.constant 2.000000e+00 : f32
    %27 = vector.broadcast %cst_8 : f32 to vector<8x128xf32>
    %28 = arith.subf %27, %26 : vector<8x128xf32>
    %29 = arith.mulf %25, %28 : vector<8x128xf32>
    %cst_9 = arith.constant 0.000000e+00 : f32
    %30 = vector.broadcast %cst_9 : f32 to vector<8x128xf32>
    %31 = arith.cmpf oge, %8, %30 : vector<8x128xf32>
    %cst_10 = arith.constant 1.000000e+00 : f32
    %32 = vector.broadcast %cst_10 : f32 to vector<8x128xf32>
    %33 = arith.select %31, %32, %16 : vector<8x128xi1>, vector<8x128xf32>
    %34 = arith.mulf %33, %29 : vector<8x128xf32>
    %35 = arith.mulf %34, %12 : vector<8x128xf32>
    %36 = vector.shape_cast %22 : vector<8x128xf32> to vector<1x8x128xf32>
    %cst_11 = arith.constant dense<0.000000e+00> : vector<8x128xf32>
    %37 = vector.multi_reduction <add>, %36, %cst_11 [0] : vector<1x8x128xf32> to vector<8x128xf32>
    %38 = arith.addf %3, %37 : vector<8x128xf32>
    %39 = vector.shape_cast %35 : vector<8x128xf32> to vector<1x8x128xf32>
    %cst_12 = arith.constant dense<0.000000e+00> : vector<8x128xf32>
    %40 = vector.multi_reduction <add>, %39, %cst_12 [0] : vector<1x8x128xf32> to vector<8x128xf32>
    %41 = arith.addf %3, %40 : vector<8x128xf32>
    %42 = vector.shape_cast %34 : vector<8x128xf32> to vector<1x8x128xf32>
    %cst_13 = arith.constant dense<0.000000e+00> : vector<8x128xf32>
    %43 = vector.multi_reduction <add>, %42, %cst_13 [0] : vector<1x8x128xf32> to vector<8x128xf32>
    %44 = arith.addf %3, %43 : vector<8x128xf32>
    %45 = vector.shape_cast %12 : vector<8x128xf32> to vector<1x8x128xf32>
    %cst_14 = arith.constant dense<0.000000e+00> : vector<8x128xf32>
    %46 = vector.multi_reduction <add>, %45, %cst_14 [0] : vector<1x8x128xf32> to vector<8x128xf32>
    %47 = arith.addf %3, %46 : vector<8x128xf32>
    %c1_i32 = arith.constant 1 : i32
    %c0_15 = arith.constant 0 : index
    %c0_16 = arith.constant 0 : index
    %c0_17 = arith.constant 0 : index
    %48 = vector.load %arg5[%c0_15, %c0_16, %c0_17] : memref<4x8x128xf32, #tpu.memory_space<vmem>>, vector<1x8x128xf32>
    %49 = vector.shape_cast %48 : vector<1x8x128xf32> to vector<8x128xf32>
    %50 = arith.addf %49, %38 : vector<8x128xf32>
    %c0_18 = arith.constant 0 : index
    %c0_19 = arith.constant 0 : index
    %c0_20 = arith.constant 0 : index
    %51 = vector.load %arg5[%c0_18, %c0_19, %c0_20] : memref<4x8x128xf32, #tpu.memory_space<vmem>>, vector<1x8x128xf32>
    %52 = vector.shape_cast %51 : vector<1x8x128xf32> to vector<8x128xf32>
    %53 = vector.shape_cast %50 : vector<8x128xf32> to vector<1x8x128xf32>
    tpu.vector_store %arg5[%c0_18, %c0_19, %c0_20], %53 {strides = array<i32>} : memref<4x8x128xf32, #tpu.memory_space<vmem>>, vector<1x8x128xf32>,
    %c1 = arith.constant 1 : index
    %c0_21 = arith.constant 0 : index
    %c0_22 = arith.constant 0 : index
    %54 = vector.load %arg5[%c1, %c0_21, %c0_22] : memref<4x8x128xf32, #tpu.memory_space<vmem>>, vector<1x8x128xf32>
    %55 = vector.shape_cast %54 : vector<1x8x128xf32> to vector<8x128xf32>
    %56 = arith.addf %55, %41 : vector<8x128xf32>
    %c1_23 = arith.constant 1 : index
    %c0_24 = arith.constant 0 : index
    %c0_25 = arith.constant 0 : index
    %57 = vector.load %arg5[%c1_23, %c0_24, %c0_25] : memref<4x8x128xf32, #tpu.memory_space<vmem>>, vector<1x8x128xf32>
    %58 = vector.shape_cast %57 : vector<1x8x128xf32> to vector<8x128xf32>
    %59 = vector.shape_cast %56 : vector<8x128xf32> to vector<1x8x128xf32>
    tpu.vector_store %arg5[%c1_23, %c0_24, %c0_25], %59 {strides = array<i32>} : memref<4x8x128xf32, #tpu.memory_space<vmem>>, vector<1x8x128xf32>,
    %c2 = arith.constant 2 : index
    %c0_26 = arith.constant 0 : index
    %c0_27 = arith.constant 0 : index
    %60 = vector.load %arg5[%c2, %c0_26, %c0_27] : memref<4x8x128xf32, #tpu.memory_space<vmem>>, vector<1x8x128xf32>
    %61 = vector.shape_cast %60 : vector<1x8x128xf32> to vector<8x128xf32>
    %62 = arith.addf %61, %44 : vector<8x128xf32>
    %c2_28 = arith.constant 2 : index
    %c0_29 = arith.constant 0 : index
    %c0_30 = arith.constant 0 : index
    %63 = vector.load %arg5[%c2_28, %c0_29, %c0_30] : memref<4x8x128xf32, #tpu.memory_space<vmem>>, vector<1x8x128xf32>
    %64 = vector.shape_cast %63 : vector<1x8x128xf32> to vector<8x128xf32>
    %65 = vector.shape_cast %62 : vector<8x128xf32> to vector<1x8x128xf32>
    tpu.vector_store %arg5[%c2_28, %c0_29, %c0_30], %65 {strides = array<i32>} : memref<4x8x128xf32, #tpu.memory_space<vmem>>, vector<1x8x128xf32>,
    %c3 = arith.constant 3 : index
    %c0_31 = arith.constant 0 : index
    %c0_32 = arith.constant 0 : index
    %66 = vector.load %arg5[%c3, %c0_31, %c0_32] : memref<4x8x128xf32, #tpu.memory_space<vmem>>, vector<1x8x128xf32>
    %67 = vector.shape_cast %66 : vector<1x8x128xf32> to vector<8x128xf32>
    %68 = arith.addf %67, %47 : vector<8x128xf32>
    %c3_33 = arith.constant 3 : index
    %c0_34 = arith.constant 0 : index
    %c0_35 = arith.constant 0 : index
    %69 = vector.load %arg5[%c3_33, %c0_34, %c0_35] : memref<4x8x128xf32, #tpu.memory_space<vmem>>, vector<1x8x128xf32>
    %70 = vector.shape_cast %69 : vector<1x8x128xf32> to vector<8x128xf32>
    %71 = vector.shape_cast %68 : vector<8x128xf32> to vector<1x8x128xf32>
    tpu.vector_store %arg5[%c3_33, %c0_34, %c0_35], %71 {strides = array<i32>} : memref<4x8x128xf32, #tpu.memory_space<vmem>>, vector<1x8x128xf32>,
    %c0_i32_36 = arith.constant 0 : i32
    %72 = arith.cmpi eq, %arg1, %c0_i32_36 : i32
    %73 = arith.extui %72 : i1 to i32
    %c0_i32_37 = arith.constant 0 : i32
    %74 = arith.cmpi ne, %73, %c0_i32_37 : i32
    scf.if %74 {
      %c0_38 = arith.constant 0 : index
      %c0_39 = arith.constant 0 : index
      %c0_40 = arith.constant 0 : index
      %75 = vector.load %arg5[%c0_38, %c0_39, %c0_40] : memref<4x8x128xf32, #tpu.memory_space<vmem>>, vector<1x8x128xf32>
      %76 = vector.shape_cast %75 : vector<1x8x128xf32> to vector<8x128xf32>
      %77 = vector.shape_cast %76 : vector<8x128xf32> to vector<1x8x128xf32>
      %cst_41 = arith.constant dense<0.000000e+00> : vector<1xf32>
      %78 = vector.multi_reduction <add>, %77, %cst_41 [1, 2] : vector<1x8x128xf32> to vector<1xf32>
      %79 = vector.shape_cast %78 : vector<1xf32> to vector<1x1x1xf32>
      %80 = vector.extract %79[0, 0, 0] : f32 from vector<1x1x1xf32>
      %81 = vector.broadcast %80 : f32 to vector<1x1xf32>
      %c1_42 = arith.constant 1 : index
      %c0_43 = arith.constant 0 : index
      %c0_44 = arith.constant 0 : index
      %82 = vector.load %arg5[%c1_42, %c0_43, %c0_44] : memref<4x8x128xf32, #tpu.memory_space<vmem>>, vector<1x8x128xf32>
      %83 = vector.shape_cast %82 : vector<1x8x128xf32> to vector<8x128xf32>
      %84 = vector.shape_cast %83 : vector<8x128xf32> to vector<1x8x128xf32>
      %cst_45 = arith.constant dense<0.000000e+00> : vector<1xf32>
      %85 = vector.multi_reduction <add>, %84, %cst_45 [1, 2] : vector<1x8x128xf32> to vector<1xf32>
      %86 = vector.shape_cast %85 : vector<1xf32> to vector<1x1x1xf32>
      %87 = vector.extract %86[0, 0, 0] : f32 from vector<1x1x1xf32>
      %88 = vector.broadcast %87 : f32 to vector<1x1xf32>
      %c2_46 = arith.constant 2 : index
      %c0_47 = arith.constant 0 : index
      %c0_48 = arith.constant 0 : index
      %89 = vector.load %arg5[%c2_46, %c0_47, %c0_48] : memref<4x8x128xf32, #tpu.memory_space<vmem>>, vector<1x8x128xf32>
      %90 = vector.shape_cast %89 : vector<1x8x128xf32> to vector<8x128xf32>
      %91 = vector.shape_cast %90 : vector<8x128xf32> to vector<1x8x128xf32>
      %cst_49 = arith.constant dense<0.000000e+00> : vector<1xf32>
      %92 = vector.multi_reduction <add>, %91, %cst_49 [1, 2] : vector<1x8x128xf32> to vector<1xf32>
      %93 = vector.shape_cast %92 : vector<1xf32> to vector<1x1x1xf32>
      %94 = vector.extract %93[0, 0, 0] : f32 from vector<1x1x1xf32>
      %95 = vector.broadcast %94 : f32 to vector<1x1xf32>
      %c3_50 = arith.constant 3 : index
      %c0_51 = arith.constant 0 : index
      %c0_52 = arith.constant 0 : index
      %96 = vector.load %arg5[%c3_50, %c0_51, %c0_52] : memref<4x8x128xf32, #tpu.memory_space<vmem>>, vector<1x8x128xf32>
      %97 = vector.shape_cast %96 : vector<1x8x128xf32> to vector<8x128xf32>
      %98 = vector.shape_cast %97 : vector<8x128xf32> to vector<1x8x128xf32>
      %cst_53 = arith.constant dense<0.000000e+00> : vector<1xf32>
      %99 = vector.multi_reduction <add>, %98, %cst_53 [1, 2] : vector<1x8x128xf32> to vector<1xf32>
      %100 = vector.shape_cast %99 : vector<1xf32> to vector<1x1x1xf32>
      %101 = vector.extract %100[0, 0, 0] : f32 from vector<1x1x1xf32>
      %102 = vector.broadcast %101 : f32 to vector<1x1xf32>
      %cst_54 = arith.constant 9.765625E-4 : f32
      %103 = vector.broadcast %cst_54 : f32 to vector<1x1xf32>
      %104 = arith.mulf %81, %103 : vector<1x1xf32>
      %cst_55 = arith.constant 2.000000e+00 : f32
      %105 = vector.broadcast %cst_55 : f32 to vector<1x1xf32>
      %106 = arith.mulf %105, %88 : vector<1x1xf32>
      %cst_56 = arith.constant 9.99999974E-6 : f32
      %107 = vector.broadcast %cst_56 : f32 to vector<1x1xf32>
      %108 = arith.addf %106, %107 : vector<1x1xf32>
      %109 = arith.addf %95, %102 : vector<1x1xf32>
      %cst_57 = arith.constant 9.99999974E-6 : f32
      %110 = vector.broadcast %cst_57 : f32 to vector<1x1xf32>
      %111 = arith.addf %109, %110 : vector<1x1xf32>
      %112 = arith.divf %108, %111 : vector<1x1xf32>
      %cst_58 = arith.constant 5.000000e-01 : f32
      %113 = vector.broadcast %cst_58 : f32 to vector<1x1xf32>
      %114 = arith.mulf %113, %104 : vector<1x1xf32>
      %cst_59 = arith.constant 1.000000e+00 : f32
      %115 = vector.broadcast %cst_59 : f32 to vector<1x1xf32>
      %116 = arith.subf %115, %112 : vector<1x1xf32>
      %117 = arith.addf %114, %116 : vector<1x1xf32>
      %118 = vector.shape_cast %117 : vector<1x1xf32> to vector<1x1x1xf32>
      %119 = vector.shape_cast %118 : vector<1x1x1xf32> to vector<1x1x1xf32>
      %120 = vector.broadcast %119 : vector<1x1x1xf32> to vector<1x8x128xf32>
      %c0_60 = arith.constant 0 : index
      %c0_61 = arith.constant 0 : index
      %c0_62 = arith.constant 0 : index
      %121 = vector.load %arg4[%c0_60, %c0_61, %c0_62] : memref<1x8x128xf32, #tpu.memory_space<vmem>>, vector<1x8x128xf32>
      tpu.vector_store %arg4[%c0_60, %c0_61, %c0_62], %120 {strides = array<i32>} : memref<1x8x128xf32, #tpu.memory_space<vmem>>, vector<1x8x128xf32>,
    } else {
    }
    return
  }
  func.func @transform_0(%arg0: i32, %arg1: i32) -> (i32, i32, i32) {
    %c0_i32 = arith.constant 0 : i32
    %c0_i32_0 = arith.constant 0 : i32
    return %arg0, %arg1, %c0_i32 : i32, i32, i32
  }
  func.func @transform_1(%arg0: i32, %arg1: i32) -> (i32, i32, i32) {
    %c0_i32 = arith.constant 0 : i32
    %c0_i32_0 = arith.constant 0 : i32
    return %arg0, %arg1, %c0_i32 : i32, i32, i32
  }
  func.func @transform_2(%arg0: i32, %arg1: i32) -> (i32, i32, i32) {
    %c0_i32 = arith.constant 0 : i32
    %c0_i32_0 = arith.constant 0 : i32
    %c0_i32_1 = arith.constant 0 : i32
    return %arg0, %c0_i32, %c0_i32_0 : i32, i32, i32
  }
}

</mosaic_0001>

<llo_original>
// kernel: tpu_custom_call.1
$region0: #{tpu_custom_call.1}
  #allocation0 [shape = 'u32[]', space=smem, size = 0x4, offset = 0x4, fixed_abs, tag = 'smem constant byte address 0x4 - core index']
  #allocation1 [shape = 'u32[144,128]{1,0:T(1,128)}', space=vmem, size = 0x12000, scoped, tag = 'internal scratch']
  #allocation2 [shape = 'f32[4,8,128]{2,1,0:T(8,128)}', space=vmem, size = 0x4000, scoped, tag = 'scratch operand']
  %s0 = inlined_call_operand.hbm [shape: f32[2,8,128], index: 0, kind: input, shape index: {}]
  %s1 = inlined_call_operand.hbm [shape: bf16[2,8,128], index: 1, kind: input, shape index: {}]
  %s2 = inlined_call_operand.hbm [shape: f32[2,8,128], index: 2, kind: output, shape index: {}]
  %s3 = sld [smem:[#allocation0]]
  $region57: #{tpu_custom_call.1} parent=0
    _
  %s5 = ssub.s32 1, %s3
  %s6 = scalar_select 0, %s5, %s3
  $region1: #{tpu_custom_call.1} parent=0
    #allocation3 [shape = 'u8[8192]{0}', space=vmem, size = 0x2000, scoped, tag = 'input window, operand 0']
    #allocation4 [shape = 's32[2]{0}', space=sflag, size = 0x8, scoped, tag = 'scoped memory for tpu_custom_call.1']
    #allocation5 [shape = 's32[2]{0}', space=sflag, size = 0x8, scoped, tag = 'scoped memory for tpu_custom_call.1']
    #allocation6 [shape = 'u8[4096]{0}', space=vmem, size = 0x1000, scoped, tag = 'input window, operand 1']
    #allocation7 [shape = 's32[2]{0}', space=sflag, size = 0x8, scoped, tag = 'scoped memory for tpu_custom_call.1']
    #allocation8 [shape = 'u8[8192]{0}', space=vmem, size = 0x2000, scoped, tag = 'output window, operand 0']
    %7 = vsyncpa [#allocation4], 0
    %s8 = scalar_lea.sflag [#allocation4], 1
    %9 = vsyncpa %s8, 0
    %10 = vsyncpa [#allocation7], 0
    %s11 = scalar_lea.sflag [#allocation7], 1
    %12 = vsyncpa %s11, 0
    %13 = vsyncpa [#allocation5], 0
    %s14 = scalar_lea.sflag [#allocation5], 1
    %15 = vsyncpa %s14, 0
    loop: start=0, step=1, limit=4
    $region2: #{tpu_custom_call.1} parent=1 // loop_pre_header
      _
    $region3: #{tpu_custom_call.1} parent=1 // loop_header
      %s17 = sphi 0, %s21
      %p18 = scmp.ge.s32.totalorder %s17, 4
      %s24 = sphi 0, %s36
      %s25 = sphi 0, %s32
      %s26 = sphi 0, %s24
      %s27 = sphi 0, %s25
      %s28 = sphi 0, %s26
      %s29 = sphi 0, %s27
      %s41 = sphi 0, %s43
      %s44 = sphi 0, %s41
      %s45 = sphi 0, %s44
      %s61 = sphi 0, %s45
      %s69 = sphi 0, %s71
      %s72 = sphi 0, %s69
      %s73 = sphi 0, %s72
      %s89 = sphi 0, %s73
      %s95 = sphi 0, %s97
      %s98 = sphi 0, %s95
      %s99 = sphi 0, %s98
      %s115 = sphi 0, %s99
    $region4: #{tpu_custom_call.1} parent=1 // loop_header_branch
      %20 = sbr.rel (%p18) target = $region8
    $region5: #{tpu_custom_call.1} parent=1 // loop_body
      %s22 = ssub.s32 %s17, 1
      %s23 = ssub.s32 %s17, 2
      %s30 = sadd.s32 1, %s25
      %p31 = scmp.ge.s32.totalorder %s30, 1
      %s32 = scalar_select %p31, 0, %s30
      %s33 = sadd.s32 1, %s24
      %s34 = scalar_select %p31, %s33, %s24
      %p35 = scmp.ge.s32.totalorder %s34, 2
      %s36 = scalar_select %p35, 0, %s34
      %s37 = ssub.s32 %s24, %s36
      %s38 = ssub.s32 %s25, %s32
      %s39 = sor.u32 %s37, %s38
      %p40 = scmp.eq.s32.totalorder %s39, 0
      %s42 = sadd.s32 %s41, 1
      %s43 = scalar_select %p40, %s41, %s42
      %p46 = pneg %p40
      %p47 = scmp.eq.s32.totalorder %s17, 1
      %p48 = por %p46, %p47
      %p49 = scmp.ne.s32.totalorder %s41, %s44
      %p50 = scmp.eq.s32.totalorder %s17, 0
      %p51 = por %p49, %p50
      %p52 = scmp.ne.s32.totalorder %s41, %s44
      %p53 = scmp.eq.s32.totalorder %s22, 1
      %p54 = por %p52, %p53
      %p55 = scmp.ne.s32.totalorder %s44, %s45
      %p56 = scmp.eq.s32.totalorder %s22, 0
      %p57 = por %p55, %p56
      %p58 = scmp.ne.s32.totalorder %s44, %s45
      %p59 = scmp.eq.s32.totalorder %s23, 1
      %p60 = por %p58, %p59
      %p62 = scmp.ne.s32.totalorder %s45, %s61
      %p63 = scmp.eq.s32.totalorder %s23, 0
      %p64 = por %p62, %p63
      %s65 = ssub.s32 %s24, %s36
      %s66 = ssub.s32 %s25, %s32
      %s67 = sor.u32 %s65, %s66
      %p68 = scmp.eq.s32.totalorder %s67, 0
      %s70 = sadd.s32 %s69, 1
      %s71 = scalar_select %p68, %s69, %s70
      %p74 = pneg %p68
      %p75 = scmp.eq.s32.totalorder %s17, 1
      %p76 = por %p74, %p75
      %p77 = scmp.ne.s32.totalorder %s69, %s72
      %p78 = scmp.eq.s32.totalorder %s17, 0
      %p79 = por %p77, %p78
      %p80 = scmp.ne.s32.totalorder %s69, %s72
      %p81 = scmp.eq.s32.totalorder %s22, 1
      %p82 = por %p80, %p81
      %p83 = scmp.ne.s32.totalorder %s72, %s73
      %p84 = scmp.eq.s32.totalorder %s22, 0
      %p85 = por %p83, %p84
      %p86 = scmp.ne.s32.totalorder %s72, %s73
      %p87 = scmp.eq.s32.totalorder %s23, 1
      %p88 = por %p86, %p87
      %p90 = scmp.ne.s32.totalorder %s73, %s89
      %p91 = scmp.eq.s32.totalorder %s23, 0
      %p92 = por %p90, %p91
      %s93 = ssub.s32 %s24, %s36
      %p94 = scmp.eq.s32.totalorder %s93, 0
      %s96 = sadd.s32 %s95, 1
      %s97 = scalar_select %p94, %s95, %s96
      %p100 = pneg %p94
      %p101 = scmp.eq.s32.totalorder %s17, 1
      %p102 = por %p100, %p101
      %p103 = scmp.ne.s32.totalorder %s95, %s98
      %p104 = scmp.eq.s32.totalorder %s17, 0
      %p105 = por %p103, %p104
      %p106 = scmp.ne.s32.totalorder %s95, %s98
      %p107 = scmp.eq.s32.totalorder %s22, 1
      %p108 = por %p106, %p107
      %p109 = scmp.ne.s32.totalorder %s98, %s99
      %p110 = scmp.eq.s32.totalorder %s22, 0
      %p111 = por %p109, %p110
      %p112 = scmp.ne.s32.totalorder %s98, %s99
      %p113 = scmp.eq.s32.totalorder %s23, 1
      %p114 = por %p112, %p113
      %p116 = scmp.ne.s32.totalorder %s99, %s115
      %p117 = scmp.eq.s32.totalorder %s23, 0
      %p118 = por %p116, %p117
      %p119 = scmp.le.s32.totalorder 1, %s17
      %p120 = scmp.lt.s32.totalorder %s17, 3
      %p121 = pnand %p119, %p120
      %p122 = pneg %p121
      // Predicated region
      $region9: #{tpu_custom_call.1} parent=5 // pred_check
        _
      $region10: #{tpu_custom_call.1} parent=5 // pred_check_branch
        %124 = sbr.rel (%p121) target = $region12
      $region11: #{tpu_custom_call.1} parent=5 // pred_region
        %s125 = ssub.s32 %s17, 1
      $region12: #{tpu_custom_call.1} parent=5 // pred_fallthru
        _
      %p126 = scmp.lt.s32.totalorder %s17, 2
      // Predicated region
      $region13: #{tpu_custom_call.1} parent=5 // pred_check
        %p127 = pneg %p126
      $region14: #{tpu_custom_call.1} parent=5 // pred_check_branch
        %129 = sbr.rel (%p127) target = $region16
      $region15: #{tpu_custom_call.1} parent=5 // pred_region
        // Predicated region
        $region17: #{tpu_custom_call.1} parent=15 // pred_check
          %p130 = pneg %p51
        $region18: #{tpu_custom_call.1} parent=15 // pred_check_branch
          %132 = sbr.rel (%p130) target = $region20
        $region19: #{tpu_custom_call.1} parent=15 // pred_region
          %s133 = sand.u32 %s41, 1
          %s134 = scalar_lea.sflag [#allocation4], %s133
          %s135 = sand.u32 %s41, 1
          %s136 = smul.addr %s135, 8
          %s137 = scalar_lea.vmem [#allocation3], %s136
          %s139 = ssub.s32 128, 128
          %140 = vsyncadd %s134, %s139
          %s141 = sadd.s32 %s25, %s24
          %s142 = smul.addr %s141, 128
          %s143 = scalar_lea.hbm %s0, %s142
          %s145 = sshll.u32 %s137, 4
          %s146 = int_to_ptr.vmem [resolvable:$true] %s145
          %148 = dma.hbm_to_vmem [thread:$0]  %s143, 128, %s146, %s134
        $region20: #{tpu_custom_call.1} parent=15 // pred_fallthru
          _
        // Predicated region
        $region21: #{tpu_custom_call.1} parent=15 // pred_check
          %p149 = pneg %p79
        $region22: #{tpu_custom_call.1} parent=15 // pred_check_branch
          %151 = sbr.rel (%p149) target = $region24
        $region23: #{tpu_custom_call.1} parent=15 // pred_region
          %s152 = sand.u32 %s69, 1
          %s153 = scalar_lea.sflag [#allocation7], %s152
          %s154 = sand.u32 %s69, 1
          %s155 = smul.addr %s154, 4
          %s156 = scalar_lea.vmem [#allocation6], %s155
          %s158 = ssub.s32 64, 64
          %159 = vsyncadd %s153, %s158
          %s160 = sadd.s32 %s25, %s24
          %s161 = smul.addr %s160, 64
          %s162 = scalar_lea.hbm %s1, %s161
          %s164 = sshll.u32 %s156, 4
          %s165 = int_to_ptr.vmem [resolvable:$true] %s164
          %167 = dma.hbm_to_vmem [thread:$0]  %s162, 64, %s165, %s153
        $region24: #{tpu_custom_call.1} parent=15 // pred_fallthru
          _
      $region16: #{tpu_custom_call.1} parent=5 // pred_fallthru
        _
      %p168 = scmp.le.s32.totalorder 1, %s17
      %p169 = scmp.lt.s32.totalorder %s17, 3
      %p170 = pnand %p168, %p169
      %p171 = pneg %p170
      // Predicated region
      $region25: #{tpu_custom_call.1} parent=5 // pred_check
        _
      $region26: #{tpu_custom_call.1} parent=5 // pred_check_branch
        %173 = sbr.rel (%p170) target = $region28
      $region27: #{tpu_custom_call.1} parent=5 // pred_region
        %s174 = ssub.s32 %s17, 1
        %s175 = sand.u32 %s44, 1
        %s176 = scalar_lea.sflag [#allocation4], %s175
        %s177 = sand.u32 %s44, 1
        %s178 = smul.addr %s177, 8
        %s179 = scalar_lea.vmem [#allocation3], %s178
        // Predicated region
        $region29: #{tpu_custom_call.1} parent=27 // pred_check
          %p180 = pneg %p57
        $region30: #{tpu_custom_call.1} parent=27 // pred_check_branch
          %182 = sbr.rel (%p180) target = $region32
        $region31: #{tpu_custom_call.1} parent=27 // pred_region
          %183 = dma.done %s176, 128
        $region32: #{tpu_custom_call.1} parent=27 // pred_fallthru
          _
        %s184 = sand.u32 %s72, 1
        %s185 = scalar_lea.sflag [#allocation7], %s184
        %s186 = sand.u32 %s72, 1
        %s187 = smul.addr %s186, 4
        %s188 = scalar_lea.vmem [#allocation6], %s187
        // Predicated region
        $region33: #{tpu_custom_call.1} parent=27 // pred_check
          %p189 = pneg %p85
        $region34: #{tpu_custom_call.1} parent=27 // pred_check_branch
          %191 = sbr.rel (%p189) target = $region36
        $region35: #{tpu_custom_call.1} parent=27 // pred_region
          %192 = dma.done %s185, 64
        $region36: #{tpu_custom_call.1} parent=27 // pred_fallthru
          _
        %s193 = sand.u32 %s44, 1
        %s194 = scalar_lea.sflag [#allocation4], %s193
        %s195 = sand.u32 %s44, 1
        %s196 = smul.addr %s195, 8
        %s197 = scalar_lea.vmem [#allocation3], %s196
        %p198 = pneg %p57
        %p199 = pneg %p54
        %s200 = sand.u32 %s72, 1
        %s201 = scalar_lea.sflag [#allocation7], %s200
        %s202 = sand.u32 %s72, 1
        %s203 = smul.addr %s202, 4
        %s204 = scalar_lea.vmem [#allocation6], %s203
        %p205 = pneg %p85
        %p206 = pneg %p82
        %p207 = pneg %p111
        %p208 = pneg %p108
        %s209 = sand.u32 %s98, 1
        %s210 = scalar_lea.sflag [#allocation5], %s209
        %s211 = sand.u32 %s98, 1
        %s212 = smul.addr %s211, 8
        %s213 = scalar_lea.vmem [#allocation8], %s212
        %p214 = scmp.eq.s32.totalorder %s27, 0
        // Predicated region
        $region37: #{tpu_custom_call.1} parent=27 // pred_check
          %p215 = pneg %p214
        $region38: #{tpu_custom_call.1} parent=27 // pred_check_branch
          %217 = sbr.rel (%p215) target = $region40
        $region39: #{tpu_custom_call.1} parent=27 // pred_region
          %218 = vst [vmem:[#allocation2] sm:$0xff] 0.0
          %219 = vst [vmem:[#allocation2 + $0x8] sm:$0xff] 0.0
          %220 = vst [vmem:[#allocation2 + $0x10] sm:$0xff] 0.0
          %221 = vst [vmem:[#allocation2 + $0x18] sm:$0xff] 0.0
        $region40: #{tpu_custom_call.1} parent=27 // pred_fallthru
          _
        %v222 = vld [vmem:[%s179] sm:$0xff]
        %v223 = vld [vmem:[%s188] sm:$0xf]
        %v224 = vunpack.c.l.bf16 %v223
        %v225 = vand.u32 2147483647, %v222
        %v226 = vsub.f32 0.0, %v225
        %v227 = vmul.f32 %v226, 1.442695
        %v228 = vpow.pop %v227
        %v229 = vmax.f32 %v222, 0.0
        %v230 = vmul.f32 %v222, %v224
        %v231 = vsub.f32 %v229, %v230
        %v232 = vadd.f32 %v228, 1.0
        %v233 = vlog2.pop %v232
        %v234 = vmul.f32 %v233, 0.6931472
        %v235 = vmul.f32 -0.5, %v228
        %v236 = vadd.f32 %v235, 1.0
        %v237 = vmul.f32 %v236, %v228
        %v238 = vand.u32 2147483647, %v228
        %vm239 = vcmp.lt.f32.partialorder %v238, 0.0004427343
        %v240 = vsel %vm239, %v237, %v234
        %v241 = vadd.f32 %v231, %v240
        %v242 = vadd.f32 %v228, 1.0
        %v243 = vrcp.pop %v242
        %v244 = vmul.f32 %v242, %v243
        %v245 = vsub.f32 2.0, %v244
        %v246 = vmul.f32 %v243, %v245
        %vm247 = vcmp.ge.f32.partialorder %v222, 0.0
        %v248 = vsel %vm247, 1.0, %v228
        %v249 = vmul.f32 %v248, %v246
        %v250 = vmul.f32 %v249, %v224
        %v251 = vadd.f32 %v241, 0.0
        %v252 = vadd.f32 %v251, 0.0
        %v253 = vadd.f32 %v250, 0.0
        %v254 = vadd.f32 %v253, 0.0
        %v255 = vadd.f32 %v249, 0.0
        %v256 = vadd.f32 %v255, 0.0
        %v257 = vadd.f32 %v224, 0.0
        %v258 = vadd.f32 %v257, 0.0
        %v259 = vld [vmem:[#allocation2] sm:$0xff]
        %v260 = vadd.f32 %v259, %v252
        %261 = vst [vmem:[#allocation2] sm:$0xff] %v260
        %s262 = scalar_lea.vmem [#allocation2], 8
        %v263 = vld [vmem:[%s262] sm:$0xff]
        %v264 = vadd.f32 %v263, %v254
        %265 = vst [vmem:[%s262] sm:$0xff] %v264
        %s266 = scalar_lea.vmem [#allocation2], 16
        %v267 = vld [vmem:[%s266] sm:$0xff]
        %v268 = vadd.f32 %v267, %v256
        %269 = vst [vmem:[%s266] sm:$0xff] %v268
        %s270 = scalar_lea.vmem [#allocation2], 24
        %v271 = vld [vmem:[%s270] sm:$0xff]
        %v272 = vadd.f32 %v271, %v258
        %273 = vst [vmem:[%s270] sm:$0xff] %v272
        // Predicated region
        $region41: #{tpu_custom_call.1} parent=27 // pred_check
          %p274 = pneg %p214
        $region42: #{tpu_custom_call.1} parent=27 // pred_check_branch
          %276 = sbr.rel (%p274) target = $region44
        $region43: #{tpu_custom_call.1} parent=27 // pred_region
          %v277 = vld [vmem:[#allocation2] sm:$0xff]
          %278 = vadd.xlane.f32.xlu0 %v277
          %v279 = vpop.xlane.xlu0 %278
          %v280 = vrot.slane %v279, 4
          %v281 = vadd.f32 %v279, %v280
          %v282 = vrot.slane %v281, 2
          %v283 = vadd.f32 %v281, %v282
          %v284 = vrot.slane %v283, 1
          %v285 = vadd.f32 %v283, %v284
          %s286 = vtos %v285
          %v287 = vstv %s286
          %v288 = vld [vmem:[%s262] sm:$0xff]
          %289 = vadd.xlane.f32.xlu0 %v288
          %v290 = vpop.xlane.xlu0 %289
          %v291 = vrot.slane %v290, 4
          %v292 = vadd.f32 %v290, %v291
          %v293 = vrot.slane %v292, 2
          %v294 = vadd.f32 %v292, %v293
          %v295 = vrot.slane %v294, 1
          %v296 = vadd.f32 %v294, %v295
          %s297 = vtos %v296
          %v298 = vstv %s297
          %v299 = vld [vmem:[%s266] sm:$0xff]
          %300 = vadd.xlane.f32.xlu0 %v299
          %v301 = vpop.xlane.xlu0 %300
          %v302 = vrot.slane %v301, 4
          %v303 = vadd.f32 %v301, %v302
          %v304 = vrot.slane %v303, 2
          %v305 = vadd.f32 %v303, %v304
          %v306 = vrot.slane %v305, 1
          %v307 = vadd.f32 %v305, %v306
          %s308 = vtos %v307
          %v309 = vstv %s308
          %v310 = vld [vmem:[%s270] sm:$0xff]
          %311 = vadd.xlane.f32.xlu0 %v310
          %v312 = vpop.xlane.xlu0 %311
          %v313 = vrot.slane %v312, 4
          %v314 = vadd.f32 %v312, %v313
          %v315 = vrot.slane %v314, 2
          %v316 = vadd.f32 %v314, %v315
          %v317 = vrot.slane %v316, 1
          %v318 = vadd.f32 %v316, %v317
          %s319 = vtos %v318
          %v320 = vstv %s319
          %v321 = vmul.f32 %v287, 0.0009765625
          %v322 = vmul.f32 %v298, 2.0
          %v323 = vadd.f32 %v322, 1e-05
          %v324 = vadd.f32 %v309, %v320
          %v325 = vadd.f32 %v324, 1e-05
          %v326 = vrcp.pop %v325
          %v327 = vmul.f32 %v323, %v326
          %v328 = vmul.f32 %v321, 0.5
          %v329 = vsub.f32 1.0, %v327
          %v330 = vadd.f32 %v328, %v329
          %331 = vst [vmem:[%s213] sm:$0xff] %v330
        $region44: #{tpu_custom_call.1} parent=27 // pred_fallthru
          _
        %s332 = sand.u32 %s98, 1
        %s333 = scalar_lea.sflag [#allocation5], %s332
        %s334 = sand.u32 %s98, 1
        %s335 = smul.addr %s334, 8
        %s336 = scalar_lea.vmem [#allocation8], %s335
        // Predicated region
        $region45: #{tpu_custom_call.1} parent=27 // pred_check
          %p337 = pneg %p108
        $region46: #{tpu_custom_call.1} parent=27 // pred_check_branch
          %339 = sbr.rel (%p337) target = $region48
        $region47: #{tpu_custom_call.1} parent=27 // pred_region
          %s341 = ssub.s32 128, 128
          %342 = vsyncadd %s333, %s341
          %s343 = smul.addr %s26, 128
          %s344 = scalar_lea.hbm %s2, %s343
          %s346 = sshll.u32 %s336, 4
          %s347 = int_to_ptr.vmem [resolvable:$true] %s346
          %349 = dma.vmem_to_hbm [thread:$0]  %s347, 128, %s344, %s333
        $region48: #{tpu_custom_call.1} parent=27 // pred_fallthru
          _
      $region28: #{tpu_custom_call.1} parent=5 // pred_fallthru
        _
      %p350 = scmp.le.s32.totalorder 2, %s17
      // Predicated region
      $region49: #{tpu_custom_call.1} parent=5 // pred_check
        %p351 = pneg %p350
      $region50: #{tpu_custom_call.1} parent=5 // pred_check_branch
        %353 = sbr.rel (%p351) target = $region52
      $region51: #{tpu_custom_call.1} parent=5 // pred_region
        %s354 = ssub.s32 %s17, 2
        // Predicated region
        $region53: #{tpu_custom_call.1} parent=51 // pred_check
          %p355 = pneg %p114
        $region54: #{tpu_custom_call.1} parent=51 // pred_check_branch
          %357 = sbr.rel (%p355) target = $region56
        $region55: #{tpu_custom_call.1} parent=51 // pred_region
          %s358 = sand.u32 %s99, 1
          %s359 = scalar_lea.sflag [#allocation5], %s358
          %s360 = sand.u32 %s99, 1
          %s361 = smul.addr %s360, 8
          %s362 = scalar_lea.vmem [#allocation8], %s361
          %363 = dma.done %s359, 128
        $region56: #{tpu_custom_call.1} parent=51 // pred_fallthru
          _
      $region52: #{tpu_custom_call.1} parent=5 // pred_fallthru
        _
    $region6: #{tpu_custom_call.1} parent=1 // loop_footer
      %s21 = sadd.s32 1, %s17
    $region7: #{tpu_custom_call.1} parent=1 // loop_footer_branch
      %16 = sbr.rel target = $region3
    $region8: #{tpu_custom_call.1} parent=1 // loop_exit
      _
    %364 = vsyncpa [#allocation4], 1
    %s365 = scalar_lea.sflag [#allocation4], 1
    %366 = vsyncpa %s365, 1
    %367 = vsyncpa [#allocation7], 1
    %s368 = scalar_lea.sflag [#allocation7], 1
    %369 = vsyncpa %s368, 1
    %370 = vsyncpa [#allocation5], 1
    %s371 = scalar_lea.sflag [#allocation5], 1
    %372 = vsyncpa %s371, 1

</llo_original>
